<compile_context>
chip_gen: v7x
topology: tpu7x:2x2x1
jax: 0.10.0
libtpu: 0.0.40
codegen_flags: <defaults>
</compile_context>

<pallas_src>
import functools
import math

import jax
import jax.numpy as jnp
from jax.experimental import pallas as pl
from jax.experimental.pallas import tpu as pltpu

LANE = 128


def _cdiv(a, b):
    return -(-a // b)


def _tpu_params():
    """Generation-aware (n_outer, vmem_budget_bytes, vmem_limit_bytes)."""
    try:
        vmem = int(pltpu.get_tpu_info().vmem_capacity_bytes)
    except Exception:  # off-TPU / older API: fall back to conservative values
        vmem = 0
    if vmem >= 100 * 1024 * 1024:
        # 128 MiB VMEM parts (v5e / v6e): single TensorCore, go big on tiles.
        return 1, 48 * 1024 * 1024, 96 * 1024 * 1024
    # 64 MiB-per-TC parts (v7x, 2 TCs) or unknown: smaller tiles, 2-way split.
    return 2, 24 * 1024 * 1024, 48 * 1024 * 1024


def _soft_dice_kernel(x_ref, t_ref, a0_ref, a1_ref, a2_ref, *, num_classes, square):
    """One spatial tile: fold per-class products down to (N, 8, 128) partials.

    x_ref : (N, C, tR, 128)  predictions, native dtype (cast per class)
    t_ref : (N, tR, 128)     label map, int8/int32 (padded positions hold C)
    a0/a1/a2_ref : (N, C, 8, 128) f32 accumulators (revisited output blocks)
       square=False: a0 += fold(x*oh),     a1 += fold(x),           a2 += fold(oh)
       square=True : a0 += fold((x*oh)^2), a1 += fold((x*(1-oh))^2), a2 += fold(((1-x)*oh)^2)
    """
    r = pl.program_id(1)  # reduction (spatial) axis, innermost

    @pl.when(r == 0)
    def _init():
        a0_ref[...] = jnp.zeros_like(a0_ref)
        a1_ref[...] = jnp.zeros_like(a1_ref)
        a2_ref[...] = jnp.zeros_like(a2_ref)

    t = t_ref[...].astype(jnp.int32)          # (N, tR, 128)
    n, tr, _ = t.shape

    def _fold(v):                              # (N, tR, 128) f32 -> (N, 8, 128)
        # Split the sublane axis at multiples of 8 (layout no-op) and reduce the
        # group axis with plain vreg adds (pure VPU, no XLU work).
        return v.reshape(n, tr // 8, 8, LANE).sum(axis=1)

    # TODO(synk): for very large C switch this static unroll to lax.fori_loop
    # with a dynamic channel slice to bound code size / vreg live ranges.
    for c in range(num_classes):               # static unroll; C is small
        xc = x_ref[:, c].astype(jnp.float32)   # per-class cast, (N, tR, 128)
        mask = t == c                          # one-hot slice of class c
        if square:
            tp_e = jnp.where(mask, xc, 0.0)
            fp_e = jnp.where(mask, 0.0, xc)
            fn_e = jnp.where(mask, 1.0 - xc, 0.0)
            a0_ref[:, c] += _fold(tp_e * tp_e)
            a1_ref[:, c] += _fold(fp_e * fp_e)
            a2_ref[:, c] += _fold(fn_e * fn_e)
        else:
            a0_ref[:, c] += _fold(jnp.where(mask, xc, 0.0))    # sum x*onehot
            a1_ref[:, c] += _fold(xc)                          # sum x
            a2_ref[:, c] += _fold(mask.astype(jnp.float32))    # sum onehot


def _choose_tiling(l, r_raw, cap_r, n_outer):
    """Pick (tile_r, n_inner); prefer an exact tiling (no x pad copy in HBM)."""
    if l % LANE == 0 and r_raw % (32 * n_outer) == 0:
        per = r_raw // n_outer
        t = min(cap_r, per)
        t -= t % 32
        while t >= 32:
            if per % t == 0:
                return t, per // t             # exact: no padding needed
            t -= 32
    per = _cdiv(r_raw, n_outer)
    tile_r = max(32, min(cap_r, _cdiv(per, 32) * 32))
    n_inner = _cdiv(per, tile_r)
    return tile_r, n_inner


def soft_dice_loss(x, y, loss_mask=None, *, apply_nonlin=None, batch_dice=False,
                   do_bg=True, smooth=1.0, square=False):
    """Fused SoftDiceLoss.forward. x: (N, C, *spatial); y: label map (N, *spatial)."""
    if apply_nonlin is not None:
        # TODO(synk): fuse the nonlinearity (e.g. channel softmax) into the kernel.
        x = apply_nonlin(x)
    if loss_mask is not None:
        # TODO(synk): per-pixel loss_mask weighting not implemented in the kernel.
        raise NotImplementedError("loss_mask is not supported")

    n, c = int(x.shape[0]), int(x.shape[1])
    l = math.prod(x.shape[2:])
    if y.size != n * l:
        # TODO(synk): one-hot ground truth (y.shape == x.shape) path not implemented.
        raise NotImplementedError("y must be a label map (N, *spatial) or (N, 1, *spatial)")

    xf = x.reshape(n, c, l)                        # keep native dtype (no f32 upcast)
    t_dtype = jnp.int8 if c <= 127 else jnp.int32  # shrink the label stream
    yf = y.reshape(n, l).astype(t_dtype)

    n_outer, budget, limit = _tpu_params()
    r_raw = _cdiv(l, LANE)
    if r_raw <= 32:
        n_outer = 1                                # tiny spatial extent: one tile

    # Per-row (128 lanes) VMEM accounting: double-buffered input blocks plus
    # in-kernel temporaries (int32 label copy + per-class f32 intermediates).
    x_item = jnp.dtype(xf.dtype).itemsize
    t_item = jnp.dtype(t_dtype).itemsize
    n_tmp = 6 if square else 4
    row_bytes = (2 * n * c * LANE * x_item         # x block, double-buffered
                 + 2 * n * LANE * t_item           # label block, double-buffered
                 + n * LANE * 4                    # int32 label temp
                 + n_tmp * n * LANE * 4)           # f32 per-class temporaries
    out_bytes = 2 * 3 * n * c * 8 * LANE * 4       # tiny double-buffered accumulators
    cap_r = max(32, ((budget - out_bytes) // row_bytes) // 32 * 32)

    tile_r, n_inner = _choose_tiling(l, r_raw, cap_r, n_outer)
    r_total = n_outer * n_inner * tile_r
    pad = r_total * LANE - l
    if pad:
        xf = jnp.pad(xf, ((0, 0), (0, 0), (0, pad)))                  # x pad = 0
        yf = jnp.pad(yf, ((0, 0), (0, pad)), constant_values=c)       # label pad = C
    xf = xf.reshape(n, c, r_total, LANE)
    yf = yf.reshape(n, r_total, LANE)

    kernel = functools.partial(_soft_dice_kernel, num_classes=c, square=square)
    acc_shape = jax.ShapeDtypeStruct((n_outer, n, c, 8, LANE), jnp.float32)
    acc_spec = pl.BlockSpec((None, n, c, 8, LANE), lambda i, r: (i, 0, 0, 0, 0))

    a0, a1, a2 = pl.pallas_call(
        kernel,
        out_shape=(acc_shape, acc_shape, acc_shape),
        grid=(n_outer, n_inner),
        in_specs=[
            pl.BlockSpec((n, c, tile_r, LANE), lambda i, r: (0, 0, i * n_inner + r, 0)),
            pl.BlockSpec((n, tile_r, LANE), lambda i, r: (0, i * n_inner + r, 0)),
        ],
        out_specs=(acc_spec, acc_spec, acc_spec),
        compiler_params=pltpu.CompilerParams(
            dimension_semantics=("parallel", "arbitrary"),
            vmem_limit_bytes=limit,
        ),
    )(xf, yf)

    # Tiny epilogue: collapse (n_outer, 8, 128) partials, form dice, reduce.
    s0 = jnp.sum(a0, axis=(0, 3, 4))               # (N, C)
    s1 = jnp.sum(a1, axis=(0, 3, 4))
    s2 = jnp.sum(a2, axis=(0, 3, 4))
    if square:
        tp, fp, fn = s0, s1, s2
    else:
        tp, fp, fn = s0, s1 - s0, s2 - s0
    if batch_dice:
        tp, fp, fn = tp.sum(0), fp.sum(0), fn.sum(0)
    dc = (2.0 * tp + smooth) / (2.0 * tp + fp + fn + smooth)
    if not do_bg:
        dc = dc[1:] if batch_dice else dc[:, 1:]
    return -jnp.mean(dc)


def soft_dice_loss_ref(x, y, *, batch_dice=False, do_bg=True, smooth=1.0, square=False):
    """Pure-JAX reference mirroring the PyTorch SoftDiceLoss (label-map gt)."""
    n, c = x.shape[0], x.shape[1]
    xf = x.reshape(n, c, -1).astype(jnp.float32)
    yf = y.reshape(n, -1).astype(jnp.int32)
    onehot = jax.nn.one_hot(yf, c, axis=1, dtype=jnp.float32)     # (N, C, L)
    tp = xf * onehot
    fp = xf * (1.0 - onehot)
    fn = (1.0 - xf) * onehot
    if square:
        tp, fp, fn = tp * tp, fp * fp, fn * fn
    axes = (0, 2) if batch_dice else (2,)
    tp, fp, fn = tp.sum(axes), fp.sum(axes), fn.sum(axes)
    dc = (2.0 * tp + smooth) / (2.0 * tp + fp + fn + smooth)
    if not do_bg:
        dc = dc[1:] if batch_dice else dc[:, 1:]
    return -jnp.mean(dc)


if __name__ == "__main__":
    key = jax.random.PRNGKey(0)
    k1, k2 = jax.random.split(key)
    N, C, H, W = 2, 4, 16, 16
    # apply_nonlin=None (module default), so feed probability-like values directly.
    x = jax.random.uniform(k1, (N, C, H, W), dtype=jnp.float32)
    y = jax.random.randint(k2, (N, H, W), 0, C, dtype=jnp.int32)

    loss = soft_dice_loss(x, y)
    loss = jax.block_until_ready(loss)
    ref = soft_dice_loss_ref(x, y)
    assert jnp.allclose(loss, ref, atol=1e-5, rtol=1e-5), (loss, ref)

    # Extra checks: exact-tiling (no-pad) path and the module's option flags.
    x2 = jax.random.uniform(k1, (2, 4, 64, 64), dtype=jnp.float32)
    y2 = jax.random.randint(k2, (2, 64, 64), 0, 4, dtype=jnp.int32)
    for kw in ({}, {"square": True}, {"batch_dice": True, "do_bg": False}):
        got = jax.block_until_ready(soft_dice_loss(x2, y2, **kw))
        want = soft_dice_loss_ref(x2, y2, **kw)
        assert jnp.allclose(got, want, atol=1e-5, rtol=1e-5), (kw, got, want)

    print("KERNEL_OK")
</pallas_src>

<mosaic_0001>
module attributes {stable_mosaic.version = 11 : i64} {
  func.func @_soft_dice_kernel(%arg0: i32, %arg1: i32, %arg2: memref<2x4x32x128xf32, #tpu.memory_space<vmem>>, %arg3: memref<2x32x128xi8, #tpu.memory_space<vmem>>, %arg4: memref<1x2x4x8x128xf32, #tpu.memory_space<vmem>>, %arg5: memref<1x2x4x8x128xf32, #tpu.memory_space<vmem>>, %arg6: memref<1x2x4x8x128xf32, #tpu.memory_space<vmem>>) attributes {dimension_semantics = [#tpu.dimension_semantics<parallel>, #tpu.dimension_semantics<arbitrary>], iteration_bounds = array<i64: 1, 1>, scalar_prefetch = 0 : i64, scratch_operands = 0 : i64, tpu.core_type = #tpu.core_type<tc>, window_params = [{transform_indices = @transform_0, window_bounds = array<i64: 2, 4, 32, 128>}, {transform_indices = @transform_1, window_bounds = array<i64: 2, 32, 128>}, {transform_indices = @transform_2, window_bounds = array<i64: 1, 2, 4, 8, 128>}, {transform_indices = @transform_3, window_bounds = array<i64: 1, 2, 4, 8, 128>}, {transform_indices = @transform_4, window_bounds = array<i64: 1, 2, 4, 8, 128>}]} {
    %c0_i32 = arith.constant 0 : i32
    %0 = arith.cmpi eq, %arg1, %c0_i32 : i32
    %1 = arith.extui %0 : i1 to i32
    %c0_i32_0 = arith.constant 0 : i32
    %2 = arith.cmpi ne, %1, %c0_i32_0 : i32
    scf.if %2 {
      %cst_152 = arith.constant 0.000000e+00 : f32
      %133 = vector.broadcast %cst_152 : f32 to vector<2x4x8x128xf32>
      %c0_153 = arith.constant 0 : index
      %c0_154 = arith.constant 0 : index
      %c0_155 = arith.constant 0 : index
      %c0_156 = arith.constant 0 : index
      %c0_157 = arith.constant 0 : index
      %134 = vector.load %arg4[%c0_153, %c0_154, %c0_155, %c0_156, %c0_157] : memref<1x2x4x8x128xf32, #tpu.memory_space<vmem>>, vector<1x2x4x8x128xf32>
      %135 = vector.shape_cast %134 : vector<1x2x4x8x128xf32> to vector<2x4x8x128xf32>
      %136 = vector.shape_cast %133 : vector<2x4x8x128xf32> to vector<1x2x4x8x128xf32>
      tpu.vector_store %arg4[%c0_153, %c0_154, %c0_155, %c0_156, %c0_157], %136 {strides = array<i32>} : memref<1x2x4x8x128xf32, #tpu.memory_space<vmem>>, vector<1x2x4x8x128xf32>,
      %cst_158 = arith.constant 0.000000e+00 : f32
      %137 = vector.broadcast %cst_158 : f32 to vector<2x4x8x128xf32>
      %c0_159 = arith.constant 0 : index
      %c0_160 = arith.constant 0 : index
      %c0_161 = arith.constant 0 : index
      %c0_162 = arith.constant 0 : index
      %c0_163 = arith.constant 0 : index
      %138 = vector.load %arg5[%c0_159, %c0_160, %c0_161, %c0_162, %c0_163] : memref<1x2x4x8x128xf32, #tpu.memory_space<vmem>>, vector<1x2x4x8x128xf32>
      %139 = vector.shape_cast %138 : vector<1x2x4x8x128xf32> to vector<2x4x8x128xf32>
      %140 = vector.shape_cast %137 : vector<2x4x8x128xf32> to vector<1x2x4x8x128xf32>
      tpu.vector_store %arg5[%c0_159, %c0_160, %c0_161, %c0_162, %c0_163], %140 {strides = array<i32>} : memref<1x2x4x8x128xf32, #tpu.memory_space<vmem>>, vector<1x2x4x8x128xf32>,
      %cst_164 = arith.constant 0.000000e+00 : f32
      %141 = vector.broadcast %cst_164 : f32 to vector<2x4x8x128xf32>
      %c0_165 = arith.constant 0 : index
      %c0_166 = arith.constant 0 : index
      %c0_167 = arith.constant 0 : index
      %c0_168 = arith.constant 0 : index
      %c0_169 = arith.constant 0 : index
      %142 = vector.load %arg6[%c0_165, %c0_166, %c0_167, %c0_168, %c0_169] : memref<1x2x4x8x128xf32, #tpu.memory_space<vmem>>, vector<1x2x4x8x128xf32>
      %143 = vector.shape_cast %142 : vector<1x2x4x8x128xf32> to vector<2x4x8x128xf32>
      %144 = vector.shape_cast %141 : vector<2x4x8x128xf32> to vector<1x2x4x8x128xf32>
      tpu.vector_store %arg6[%c0_165, %c0_166, %c0_167, %c0_168, %c0_169], %144 {strides = array<i32>} : memref<1x2x4x8x128xf32, #tpu.memory_space<vmem>>, vector<1x2x4x8x128xf32>,
    } else {
    }
    %c0 = arith.constant 0 : index
    %c0_1 = arith.constant 0 : index
    %c0_2 = arith.constant 0 : index
    %3 = vector.load %arg3[%c0, %c0_1, %c0_2] : memref<2x32x128xi8, #tpu.memory_space<vmem>>, vector<2x32x128xi8>
    %4 = arith.extsi %3 : vector<2x32x128xi8> to vector<2x32x128xi32>
    %c0_3 = arith.constant 0 : index
    %c0_4 = arith.constant 0 : index
    %c0_5 = arith.constant 0 : index
    %c0_6 = arith.constant 0 : index
    %5 = vector.load %arg2[%c0_3, %c0_4, %c0_5, %c0_6] : memref<2x4x32x128xf32, #tpu.memory_space<vmem>>, vector<2x1x32x128xf32>
    %6 = vector.shape_cast %5 : vector<2x1x32x128xf32> to vector<2x32x128xf32>
    %c0_i32_7 = arith.constant 0 : i32
    %7 = vector.broadcast %c0_i32_7 : i32 to vector<2x32x128xi32>
    %8 = arith.cmpi eq, %4, %7 : vector<2x32x128xi32>
    %c0_8 = arith.constant 0 : index
    %c0_9 = arith.constant 0 : index
    %c0_10 = arith.constant 0 : index
    %c0_11 = arith.constant 0 : index
    %c0_12 = arith.constant 0 : index
    %9 = vector.load %arg4[%c0_8, %c0_9, %c0_10, %c0_11, %c0_12] : memref<1x2x4x8x128xf32, #tpu.memory_space<vmem>>, vector<1x2x1x8x128xf32>
    %10 = vector.shape_cast %9 : vector<1x2x1x8x128xf32> to vector<2x8x128xf32>
    %cst = arith.constant 0.000000e+00 : f32
    %11 = vector.broadcast %cst : f32 to vector<2x32x128xf32>
    %12 = arith.select %8, %6, %11 : vector<2x32x128xi1>, vector<2x32x128xf32>
    %13 = vector.shape_cast %12 : vector<2x32x128xf32> to vector<2x4x8x128xf32>
    %cst_13 = arith.constant dense<0.000000e+00> : vector<2x8x128xf32>
    %14 = vector.multi_reduction <add>, %13, %cst_13 [1] : vector<2x4x8x128xf32> to vector<2x8x128xf32>
    %15 = arith.addf %10, %14 : vector<2x8x128xf32>
    %c0_14 = arith.constant 0 : index
    %c0_15 = arith.constant 0 : index
    %c0_16 = arith.constant 0 : index
    %c0_17 = arith.constant 0 : index
    %c0_18 = arith.constant 0 : index
    %16 = vector.load %arg4[%c0_14, %c0_15, %c0_16, %c0_17, %c0_18] : memref<1x2x4x8x128xf32, #tpu.memory_space<vmem>>, vector<1x2x1x8x128xf32>
    %17 = vector.shape_cast %16 : vector<1x2x1x8x128xf32> to vector<2x8x128xf32>
    %18 = vector.shape_cast %15 : vector<2x8x128xf32> to vector<1x2x1x8x128xf32>
    tpu.vector_store %arg4[%c0_14, %c0_15, %c0_16, %c0_17, %c0_18], %18 {strides = array<i32>} : memref<1x2x4x8x128xf32, #tpu.memory_space<vmem>>, vector<1x2x1x8x128xf32>,
    %c0_19 = arith.constant 0 : index
    %c0_20 = arith.constant 0 : index
    %c0_21 = arith.constant 0 : index
    %c0_22 = arith.constant 0 : index
    %c0_23 = arith.constant 0 : index
    %19 = vector.load %arg5[%c0_19, %c0_20, %c0_21, %c0_22, %c0_23] : memref<1x2x4x8x128xf32, #tpu.memory_space<vmem>>, vector<1x2x1x8x128xf32>
    %20 = vector.shape_cast %19 : vector<1x2x1x8x128xf32> to vector<2x8x128xf32>
    %21 = vector.shape_cast %6 : vector<2x32x128xf32> to vector<2x4x8x128xf32>
    %cst_24 = arith.constant dense<0.000000e+00> : vector<2x8x128xf32>
    %22 = vector.multi_reduction <add>, %21, %cst_24 [1] : vector<2x4x8x128xf32> to vector<2x8x128xf32>
    %23 = arith.addf %20, %22 : vector<2x8x128xf32>
    %c0_25 = arith.constant 0 : index
    %c0_26 = arith.constant 0 : index
    %c0_27 = arith.constant 0 : index
    %c0_28 = arith.constant 0 : index
    %c0_29 = arith.constant 0 : index
    %24 = vector.load %arg5[%c0_25, %c0_26, %c0_27, %c0_28, %c0_29] : memref<1x2x4x8x128xf32, #tpu.memory_space<vmem>>, vector<1x2x1x8x128xf32>
    %25 = vector.shape_cast %24 : vector<1x2x1x8x128xf32> to vector<2x8x128xf32>
    %26 = vector.shape_cast %23 : vector<2x8x128xf32> to vector<1x2x1x8x128xf32>
    tpu.vector_store %arg5[%c0_25, %c0_26, %c0_27, %c0_28, %c0_29], %26 {strides = array<i32>} : memref<1x2x4x8x128xf32, #tpu.memory_space<vmem>>, vector<1x2x1x8x128xf32>,
    %c0_30 = arith.constant 0 : index
    %c0_31 = arith.constant 0 : index
    %c0_32 = arith.constant 0 : index
    %c0_33 = arith.constant 0 : index
    %c0_34 = arith.constant 0 : index
    %27 = vector.load %arg6[%c0_30, %c0_31, %c0_32, %c0_33, %c0_34] : memref<1x2x4x8x128xf32, #tpu.memory_space<vmem>>, vector<1x2x1x8x128xf32>
    %28 = vector.shape_cast %27 : vector<1x2x1x8x128xf32> to vector<2x8x128xf32>
    %29 = arith.extui %8 : vector<2x32x128xi1> to vector<2x32x128xi32>
    %30 = arith.sitofp %29 : vector<2x32x128xi32> to vector<2x32x128xf32>
    %31 = vector.shape_cast %30 : vector<2x32x128xf32> to vector<2x4x8x128xf32>
    %cst_35 = arith.constant dense<0.000000e+00> : vector<2x8x128xf32>
    %32 = vector.multi_reduction <add>, %31, %cst_35 [1] : vector<2x4x8x128xf32> to vector<2x8x128xf32>
    %33 = arith.addf %28, %32 : vector<2x8x128xf32>
    %c0_36 = arith.constant 0 : index
    %c0_37 = arith.constant 0 : index
    %c0_38 = arith.constant 0 : index
    %c0_39 = arith.constant 0 : index
    %c0_40 = arith.constant 0 : index
    %34 = vector.load %arg6[%c0_36, %c0_37, %c0_38, %c0_39, %c0_40] : memref<1x2x4x8x128xf32, #tpu.memory_space<vmem>>, vector<1x2x1x8x128xf32>
    %35 = vector.shape_cast %34 : vector<1x2x1x8x128xf32> to vector<2x8x128xf32>
    %36 = vector.shape_cast %33 : vector<2x8x128xf32> to vector<1x2x1x8x128xf32>
    tpu.vector_store %arg6[%c0_36, %c0_37, %c0_38, %c0_39, %c0_40], %36 {strides = array<i32>} : memref<1x2x4x8x128xf32, #tpu.memory_space<vmem>>, vector<1x2x1x8x128xf32>,
    %c0_41 = arith.constant 0 : index
    %c1 = arith.constant 1 : index
    %c0_42 = arith.constant 0 : index
    %c0_43 = arith.constant 0 : index
    %37 = vector.load %arg2[%c0_41, %c1, %c0_42, %c0_43] : memref<2x4x32x128xf32, #tpu.memory_space<vmem>>, vector<2x1x32x128xf32>
    %38 = vector.shape_cast %37 : vector<2x1x32x128xf32> to vector<2x32x128xf32>
    %c1_i32 = arith.constant 1 : i32
    %39 = vector.broadcast %c1_i32 : i32 to vector<2x32x128xi32>
    %40 = arith.cmpi eq, %4, %39 : vector<2x32x128xi32>
    %c0_44 = arith.constant 0 : index
    %c0_45 = arith.constant 0 : index
    %c1_46 = arith.constant 1 : index
    %c0_47 = arith.constant 0 : index
    %c0_48 = arith.constant 0 : index
    %41 = vector.load %arg4[%c0_44, %c0_45, %c1_46, %c0_47, %c0_48] : memref<1x2x4x8x128xf32, #tpu.memory_space<vmem>>, vector<1x2x1x8x128xf32>
    %42 = vector.shape_cast %41 : vector<1x2x1x8x128xf32> to vector<2x8x128xf32>
    %cst_49 = arith.constant 0.000000e+00 : f32
    %43 = vector.broadcast %cst_49 : f32 to vector<2x32x128xf32>
    %44 = arith.select %40, %38, %43 : vector<2x32x128xi1>, vector<2x32x128xf32>
    %45 = vector.shape_cast %44 : vector<2x32x128xf32> to vector<2x4x8x128xf32>
    %cst_50 = arith.constant dense<0.000000e+00> : vector<2x8x128xf32>
    %46 = vector.multi_reduction <add>, %45, %cst_50 [1] : vector<2x4x8x128xf32> to vector<2x8x128xf32>
    %47 = arith.addf %42, %46 : vector<2x8x128xf32>
    %c0_51 = arith.constant 0 : index
    %c0_52 = arith.constant 0 : index
    %c1_53 = arith.constant 1 : index
    %c0_54 = arith.constant 0 : index
    %c0_55 = arith.constant 0 : index
    %48 = vector.load %arg4[%c0_51, %c0_52, %c1_53, %c0_54, %c0_55] : memref<1x2x4x8x128xf32, #tpu.memory_space<vmem>>, vector<1x2x1x8x128xf32>
    %49 = vector.shape_cast %48 : vector<1x2x1x8x128xf32> to vector<2x8x128xf32>
    %50 = vector.shape_cast %47 : vector<2x8x128xf32> to vector<1x2x1x8x128xf32>
    tpu.vector_store %arg4[%c0_51, %c0_52, %c1_53, %c0_54, %c0_55], %50 {strides = array<i32>} : memref<1x2x4x8x128xf32, #tpu.memory_space<vmem>>, vector<1x2x1x8x128xf32>,
    %c0_56 = arith.constant 0 : index
    %c0_57 = arith.constant 0 : index
    %c1_58 = arith.constant 1 : index
    %c0_59 = arith.constant 0 : index
    %c0_60 = arith.constant 0 : index
    %51 = vector.load %arg5[%c0_56, %c0_57, %c1_58, %c0_59, %c0_60] : memref<1x2x4x8x128xf32, #tpu.memory_space<vmem>>, vector<1x2x1x8x128xf32>
    %52 = vector.shape_cast %51 : vector<1x2x1x8x128xf32> to vector<2x8x128xf32>
    %53 = vector.shape_cast %38 : vector<2x32x128xf32> to vector<2x4x8x128xf32>
    %cst_61 = arith.constant dense<0.000000e+00> : vector<2x8x128xf32>
    %54 = vector.multi_reduction <add>, %53, %cst_61 [1] : vector<2x4x8x128xf32> to vector<2x8x128xf32>
    %55 = arith.addf %52, %54 : vector<2x8x128xf32>
    %c0_62 = arith.constant 0 : index
    %c0_63 = arith.constant 0 : index
    %c1_64 = arith.constant 1 : index
    %c0_65 = arith.constant 0 : index
    %c0_66 = arith.constant 0 : index
    %56 = vector.load %arg5[%c0_62, %c0_63, %c1_64, %c0_65, %c0_66] : memref<1x2x4x8x128xf32, #tpu.memory_space<vmem>>, vector<1x2x1x8x128xf32>
    %57 = vector.shape_cast %56 : vector<1x2x1x8x128xf32> to vector<2x8x128xf32>
    %58 = vector.shape_cast %55 : vector<2x8x128xf32> to vector<1x2x1x8x128xf32>
    tpu.vector_store %arg5[%c0_62, %c0_63, %c1_64, %c0_65, %c0_66], %58 {strides = array<i32>} : memref<1x2x4x8x128xf32, #tpu.memory_space<vmem>>, vector<1x2x1x8x128xf32>,
    %c0_67 = arith.constant 0 : index
    %c0_68 = arith.constant 0 : index
    %c1_69 = arith.constant 1 : index
    %c0_70 = arith.constant 0 : index
    %c0_71 = arith.constant 0 : index
    %59 = vector.load %arg6[%c0_67, %c0_68, %c1_69, %c0_70, %c0_71] : memref<1x2x4x8x128xf32, #tpu.memory_space<vmem>>, vector<1x2x1x8x128xf32>
    %60 = vector.shape_cast %59 : vector<1x2x1x8x128xf32> to vector<2x8x128xf32>
    %61 = arith.extui %40 : vector<2x32x128xi1> to vector<2x32x128xi32>
    %62 = arith.sitofp %61 : vector<2x32x128xi32> to vector<2x32x128xf32>
    %63 = vector.shape_cast %62 : vector<2x32x128xf32> to vector<2x4x8x128xf32>
    %cst_72 = arith.constant dense<0.000000e+00> : vector<2x8x128xf32>
    %64 = vector.multi_reduction <add>, %63, %cst_72 [1] : vector<2x4x8x128xf32> to vector<2x8x128xf32>
    %65 = arith.addf %60, %64 : vector<2x8x128xf32>
    %c0_73 = arith.constant 0 : index
    %c0_74 = arith.constant 0 : index
    %c1_75 = arith.constant 1 : index
    %c0_76 = arith.constant 0 : index
    %c0_77 = arith.constant 0 : index
    %66 = vector.load %arg6[%c0_73, %c0_74, %c1_75, %c0_76, %c0_77] : memref<1x2x4x8x128xf32, #tpu.memory_space<vmem>>, vector<1x2x1x8x128xf32>
    %67 = vector.shape_cast %66 : vector<1x2x1x8x128xf32> to vector<2x8x128xf32>
    %68 = vector.shape_cast %65 : vector<2x8x128xf32> to vector<1x2x1x8x128xf32>
    tpu.vector_store %arg6[%c0_73, %c0_74, %c1_75, %c0_76, %c0_77], %68 {strides = array<i32>} : memref<1x2x4x8x128xf32, #tpu.memory_space<vmem>>, vector<1x2x1x8x128xf32>,
    %c0_78 = arith.constant 0 : index
    %c2 = arith.constant 2 : index
    %c0_79 = arith.constant 0 : index
    %c0_80 = arith.constant 0 : index
    %69 = vector.load %arg2[%c0_78, %c2, %c0_79, %c0_80] : memref<2x4x32x128xf32, #tpu.memory_space<vmem>>, vector<2x1x32x128xf32>
    %70 = vector.shape_cast %69 : vector<2x1x32x128xf32> to vector<2x32x128xf32>
    %c2_i32 = arith.constant 2 : i32
    %71 = vector.broadcast %c2_i32 : i32 to vector<2x32x128xi32>
    %72 = arith.cmpi eq, %4, %71 : vector<2x32x128xi32>
    %c0_81 = arith.constant 0 : index
    %c0_82 = arith.constant 0 : index
    %c2_83 = arith.constant 2 : index
    %c0_84 = arith.constant 0 : index
    %c0_85 = arith.constant 0 : index
    %73 = vector.load %arg4[%c0_81, %c0_82, %c2_83, %c0_84, %c0_85] : memref<1x2x4x8x128xf32, #tpu.memory_space<vmem>>, vector<1x2x1x8x128xf32>
    %74 = vector.shape_cast %73 : vector<1x2x1x8x128xf32> to vector<2x8x128xf32>
    %cst_86 = arith.constant 0.000000e+00 : f32
    %75 = vector.broadcast %cst_86 : f32 to vector<2x32x128xf32>
    %76 = arith.select %72, %70, %75 : vector<2x32x128xi1>, vector<2x32x128xf32>
    %77 = vector.shape_cast %76 : vector<2x32x128xf32> to vector<2x4x8x128xf32>
    %cst_87 = arith.constant dense<0.000000e+00> : vector<2x8x128xf32>
    %78 = vector.multi_reduction <add>, %77, %cst_87 [1] : vector<2x4x8x128xf32> to vector<2x8x128xf32>
    %79 = arith.addf %74, %78 : vector<2x8x128xf32>
    %c0_88 = arith.constant 0 : index
    %c0_89 = arith.constant 0 : index
    %c2_90 = arith.constant 2 : index
    %c0_91 = arith.constant 0 : index
    %c0_92 = arith.constant 0 : index
    %80 = vector.load %arg4[%c0_88, %c0_89, %c2_90, %c0_91, %c0_92] : memref<1x2x4x8x128xf32, #tpu.memory_space<vmem>>, vector<1x2x1x8x128xf32>
    %81 = vector.shape_cast %80 : vector<1x2x1x8x128xf32> to vector<2x8x128xf32>
    %82 = vector.shape_cast %79 : vector<2x8x128xf32> to vector<1x2x1x8x128xf32>
    tpu.vector_store %arg4[%c0_88, %c0_89, %c2_90, %c0_91, %c0_92], %82 {strides = array<i32>} : memref<1x2x4x8x128xf32, #tpu.memory_space<vmem>>, vector<1x2x1x8x128xf32>,
    %c0_93 = arith.constant 0 : index
    %c0_94 = arith.constant 0 : index
    %c2_95 = arith.constant 2 : index
    %c0_96 = arith.constant 0 : index
    %c0_97 = arith.constant 0 : index
    %83 = vector.load %arg5[%c0_93, %c0_94, %c2_95, %c0_96, %c0_97] : memref<1x2x4x8x128xf32, #tpu.memory_space<vmem>>, vector<1x2x1x8x128xf32>
    %84 = vector.shape_cast %83 : vector<1x2x1x8x128xf32> to vector<2x8x128xf32>
    %85 = vector.shape_cast %70 : vector<2x32x128xf32> to vector<2x4x8x128xf32>
    %cst_98 = arith.constant dense<0.000000e+00> : vector<2x8x128xf32>
    %86 = vector.multi_reduction <add>, %85, %cst_98 [1] : vector<2x4x8x128xf32> to vector<2x8x128xf32>
    %87 = arith.addf %84, %86 : vector<2x8x128xf32>
    %c0_99 = arith.constant 0 : index
    %c0_100 = arith.constant 0 : index
    %c2_101 = arith.constant 2 : index
    %c0_102 = arith.constant 0 : index
    %c0_103 = arith.constant 0 : index
    %88 = vector.load %arg5[%c0_99, %c0_100, %c2_101, %c0_102, %c0_103] : memref<1x2x4x8x128xf32, #tpu.memory_space<vmem>>, vector<1x2x1x8x128xf32>
    %89 = vector.shape_cast %88 : vector<1x2x1x8x128xf32> to vector<2x8x128xf32>
    %90 = vector.shape_cast %87 : vector<2x8x128xf32> to vector<1x2x1x8x128xf32>
    tpu.vector_store %arg5[%c0_99, %c0_100, %c2_101, %c0_102, %c0_103], %90 {strides = array<i32>} : memref<1x2x4x8x128xf32, #tpu.memory_space<vmem>>, vector<1x2x1x8x128xf32>,
    %c0_104 = arith.constant 0 : index
    %c0_105 = arith.constant 0 : index
    %c2_106 = arith.constant 2 : index
    %c0_107 = arith.constant 0 : index
    %c0_108 = arith.constant 0 : index
    %91 = vector.load %arg6[%c0_104, %c0_105, %c2_106, %c0_107, %c0_108] : memref<1x2x4x8x128xf32, #tpu.memory_space<vmem>>, vector<1x2x1x8x128xf32>
    %92 = vector.shape_cast %91 : vector<1x2x1x8x128xf32> to vector<2x8x128xf32>
    %93 = arith.extui %72 : vector<2x32x128xi1> to vector<2x32x128xi32>
    %94 = arith.sitofp %93 : vector<2x32x128xi32> to vector<2x32x128xf32>
    %95 = vector.shape_cast %94 : vector<2x32x128xf32> to vector<2x4x8x128xf32>
    %cst_109 = arith.constant dense<0.000000e+00> : vector<2x8x128xf32>
    %96 = vector.multi_reduction <add>, %95, %cst_109 [1] : vector<2x4x8x128xf32> to vector<2x8x128xf32>
    %97 = arith.addf %92, %96 : vector<2x8x128xf32>
    %c0_110 = arith.constant 0 : index
    %c0_111 = arith.constant 0 : index
    %c2_112 = arith.constant 2 : index
    %c0_113 = arith.constant 0 : index
    %c0_114 = arith.constant 0 : index
    %98 = vector.load %arg6[%c0_110, %c0_111, %c2_112, %c0_113, %c0_114] : memref<1x2x4x8x128xf32, #tpu.memory_space<vmem>>, vector<1x2x1x8x128xf32>
    %99 = vector.shape_cast %98 : vector<1x2x1x8x128xf32> to vector<2x8x128xf32>
    %100 = vector.shape_cast %97 : vector<2x8x128xf32> to vector<1x2x1x8x128xf32>
    tpu.vector_store %arg6[%c0_110, %c0_111, %c2_112, %c0_113, %c0_114], %100 {strides = array<i32>} : memref<1x2x4x8x128xf32, #tpu.memory_space<vmem>>, vector<1x2x1x8x128xf32>,
    %c0_115 = arith.constant 0 : index
    %c3 = arith.constant 3 : index
    %c0_116 = arith.constant 0 : index
    %c0_117 = arith.constant 0 : index
    %101 = vector.load %arg2[%c0_115, %c3, %c0_116, %c0_117] : memref<2x4x32x128xf32, #tpu.memory_space<vmem>>, vector<2x1x32x128xf32>
    %102 = vector.shape_cast %101 : vector<2x1x32x128xf32> to vector<2x32x128xf32>
    %c3_i32 = arith.constant 3 : i32
    %103 = vector.broadcast %c3_i32 : i32 to vector<2x32x128xi32>
    %104 = arith.cmpi eq, %4, %103 : vector<2x32x128xi32>
    %c0_118 = arith.constant 0 : index
    %c0_119 = arith.constant 0 : index
    %c3_120 = arith.constant 3 : index
    %c0_121 = arith.constant 0 : index
    %c0_122 = arith.constant 0 : index
    %105 = vector.load %arg4[%c0_118, %c0_119, %c3_120, %c0_121, %c0_122] : memref<1x2x4x8x128xf32, #tpu.memory_space<vmem>>, vector<1x2x1x8x128xf32>
    %106 = vector.shape_cast %105 : vector<1x2x1x8x128xf32> to vector<2x8x128xf32>
    %cst_123 = arith.constant 0.000000e+00 : f32
    %107 = vector.broadcast %cst_123 : f32 to vector<2x32x128xf32>
    %108 = arith.select %104, %102, %107 : vector<2x32x128xi1>, vector<2x32x128xf32>
    %109 = vector.shape_cast %108 : vector<2x32x128xf32> to vector<2x4x8x128xf32>
    %cst_124 = arith.constant dense<0.000000e+00> : vector<2x8x128xf32>
    %110 = vector.multi_reduction <add>, %109, %cst_124 [1] : vector<2x4x8x128xf32> to vector<2x8x128xf32>
    %111 = arith.addf %106, %110 : vector<2x8x128xf32>
    %c0_125 = arith.constant 0 : index
    %c0_126 = arith.constant 0 : index
    %c3_127 = arith.constant 3 : index
    %c0_128 = arith.constant 0 : index
    %c0_129 = arith.constant 0 : index
    %112 = vector.load %arg4[%c0_125, %c0_126, %c3_127, %c0_128, %c0_129] : memref<1x2x4x8x128xf32, #tpu.memory_space<vmem>>, vector<1x2x1x8x128xf32>
    %113 = vector.shape_cast %112 : vector<1x2x1x8x128xf32> to vector<2x8x128xf32>
    %114 = vector.shape_cast %111 : vector<2x8x128xf32> to vector<1x2x1x8x128xf32>
    tpu.vector_store %arg4[%c0_125, %c0_126, %c3_127, %c0_128, %c0_129], %114 {strides = array<i32>} : memref<1x2x4x8x128xf32, #tpu.memory_space<vmem>>, vector<1x2x1x8x128xf32>,
    %c0_130 = arith.constant 0 : index
    %c0_131 = arith.constant 0 : index
    %c3_132 = arith.constant 3 : index
    %c0_133 = arith.constant 0 : index
    %c0_134 = arith.constant 0 : index
    %115 = vector.load %arg5[%c0_130, %c0_131, %c3_132, %c0_133, %c0_134] : memref<1x2x4x8x128xf32, #tpu.memory_space<vmem>>, vector<1x2x1x8x128xf32>
    %116 = vector.shape_cast %115 : vector<1x2x1x8x128xf32> to vector<2x8x128xf32>
    %117 = vector.shape_cast %102 : vector<2x32x128xf32> to vector<2x4x8x128xf32>
    %cst_135 = arith.constant dense<0.000000e+00> : vector<2x8x128xf32>
    %118 = vector.multi_reduction <add>, %117, %cst_135 [1] : vector<2x4x8x128xf32> to vector<2x8x128xf32>
    %119 = arith.addf %116, %118 : vector<2x8x128xf32>
    %c0_136 = arith.constant 0 : index
    %c0_137 = arith.constant 0 : index
    %c3_138 = arith.constant 3 : index
    %c0_139 = arith.constant 0 : index
    %c0_140 = arith.constant 0 : index
    %120 = vector.load %arg5[%c0_136, %c0_137, %c3_138, %c0_139, %c0_140] : memref<1x2x4x8x128xf32, #tpu.memory_space<vmem>>, vector<1x2x1x8x128xf32>
    %121 = vector.shape_cast %120 : vector<1x2x1x8x128xf32> to vector<2x8x128xf32>
    %122 = vector.shape_cast %119 : vector<2x8x128xf32> to vector<1x2x1x8x128xf32>
    tpu.vector_store %arg5[%c0_136, %c0_137, %c3_138, %c0_139, %c0_140], %122 {strides = array<i32>} : memref<1x2x4x8x128xf32, #tpu.memory_space<vmem>>, vector<1x2x1x8x128xf32>,
    %c0_141 = arith.constant 0 : index
    %c0_142 = arith.constant 0 : index
    %c3_143 = arith.constant 3 : index
    %c0_144 = arith.constant 0 : index
    %c0_145 = arith.constant 0 : index
    %123 = vector.load %arg6[%c0_141, %c0_142, %c3_143, %c0_144, %c0_145] : memref<1x2x4x8x128xf32, #tpu.memory_space<vmem>>, vector<1x2x1x8x128xf32>
    %124 = vector.shape_cast %123 : vector<1x2x1x8x128xf32> to vector<2x8x128xf32>
    %125 = arith.extui %104 : vector<2x32x128xi1> to vector<2x32x128xi32>
    %126 = arith.sitofp %125 : vector<2x32x128xi32> to vector<2x32x128xf32>
    %127 = vector.shape_cast %126 : vector<2x32x128xf32> to vector<2x4x8x128xf32>
    %cst_146 = arith.constant dense<0.000000e+00> : vector<2x8x128xf32>
    %128 = vector.multi_reduction <add>, %127, %cst_146 [1] : vector<2x4x8x128xf32> to vector<2x8x128xf32>
    %129 = arith.addf %124, %128 : vector<2x8x128xf32>
    %c0_147 = arith.constant 0 : index
    %c0_148 = arith.constant 0 : index
    %c3_149 = arith.constant 3 : index
    %c0_150 = arith.constant 0 : index
    %c0_151 = arith.constant 0 : index
    %130 = vector.load %arg6[%c0_147, %c0_148, %c3_149, %c0_150, %c0_151] : memref<1x2x4x8x128xf32, #tpu.memory_space<vmem>>, vector<1x2x1x8x128xf32>
    %131 = vector.shape_cast %130 : vector<1x2x1x8x128xf32> to vector<2x8x128xf32>
    %132 = vector.shape_cast %129 : vector<2x8x128xf32> to vector<1x2x1x8x128xf32>
    tpu.vector_store %arg6[%c0_147, %c0_148, %c3_149, %c0_150, %c0_151], %132 {strides = array<i32>} : memref<1x2x4x8x128xf32, #tpu.memory_space<vmem>>, vector<1x2x1x8x128xf32>,
    return
  }
  func.func @transform_0(%arg0: i32, %arg1: i32) -> (i32, i32, i32, i32) {
    %c1_i32 = arith.constant 1 : i32
    %0 = arith.muli %arg0, %c1_i32 : i32
    %1 = arith.addi %0, %arg1 : i32
    %c0_i32 = arith.constant 0 : i32
    %c0_i32_0 = arith.constant 0 : i32
    %c0_i32_1 = arith.constant 0 : i32
    %c0_i32_2 = arith.constant 0 : i32
    return %c0_i32, %c0_i32_0, %1, %c0_i32_1 : i32, i32, i32, i32
  }
  func.func @transform_1(%arg0: i32, %arg1: i32) -> (i32, i32, i32) {
    %c1_i32 = arith.constant 1 : i32
    %0 = arith.muli %arg0, %c1_i32 : i32
    %1 = arith.addi %0, %arg1 : i32
    %c0_i32 = arith.constant 0 : i32
    %c0_i32_0 = arith.constant 0 : i32
    %c0_i32_1 = arith.constant 0 : i32
    return %c0_i32, %1, %c0_i32_0 : i32, i32, i32
  }
  func.func @transform_2(%arg0: i32, %arg1: i32) -> (i32, i32, i32, i32, i32) {
    %c0_i32 = arith.constant 0 : i32
    %c0_i32_0 = arith.constant 0 : i32
    %c0_i32_1 = arith.constant 0 : i32
    %c0_i32_2 = arith.constant 0 : i32
    %c0_i32_3 = arith.constant 0 : i32
    return %arg0, %c0_i32, %c0_i32_0, %c0_i32_1, %c0_i32_2 : i32, i32, i32, i32, i32
  }
  func.func @transform_3(%arg0: i32, %arg1: i32) -> (i32, i32, i32, i32, i32) {
    %c0_i32 = arith.constant 0 : i32
    %c0_i32_0 = arith.constant 0 : i32
    %c0_i32_1 = arith.constant 0 : i32
    %c0_i32_2 = arith.constant 0 : i32
    %c0_i32_3 = arith.constant 0 : i32
    return %arg0, %c0_i32, %c0_i32_0, %c0_i32_1, %c0_i32_2 : i32, i32, i32, i32, i32
  }
  func.func @transform_4(%arg0: i32, %arg1: i32) -> (i32, i32, i32, i32, i32) {
    %c0_i32 = arith.constant 0 : i32
    %c0_i32_0 = arith.constant 0 : i32
    %c0_i32_1 = arith.constant 0 : i32
    %c0_i32_2 = arith.constant 0 : i32
    %c0_i32_3 = arith.constant 0 : i32
    return %arg0, %c0_i32, %c0_i32_0, %c0_i32_1, %c0_i32_2 : i32, i32, i32, i32, i32
  }
}

</mosaic_0001>

<llo_original>
// kernel: tpu_custom_call.1
$region0: #{tpu_custom_call.1}
  #allocation0 [shape = 'u32[]', space=smem, size = 0x4, offset = 0x4, fixed_abs, tag = 'smem constant byte address 0x4 - core index']
  #allocation1 [shape = 'u32[144,128]{1,0:T(1,128)}', space=vmem, size = 0x12000, scoped, tag = 'internal scratch']
  %s0 = inlined_call_operand.hbm [shape: f32[2,4,32,128], index: 0, kind: input, shape index: {}]
  %s1 = inlined_call_operand.hbm [shape: s8[2,32,128], index: 1, kind: input, shape index: {}]
  %s2 = inlined_call_operand.hbm [shape: f32[1,2,4,8,128], index: 2, kind: output, shape index: {0}]
  %s3 = inlined_call_operand.hbm [shape: f32[1,2,4,8,128], index: 3, kind: output, shape index: {1}]
  %s4 = inlined_call_operand.hbm [shape: f32[1,2,4,8,128], index: 4, kind: output, shape index: {2}]
  %5 = xla_tuple %s2, %s3, %s4
  %s6 = sld [smem:[#allocation0]]
  $region46: #{tpu_custom_call.1} parent=0
    _
  %s8 = ssub.s32 1, %s6
  %s9 = scalar_select 0, %s8, %s6
  $region1: #{tpu_custom_call.1} parent=0
    #allocation2 [shape = 'u8[131072]{0}', space=vmem, size = 0x20000, scoped, tag = 'input window, operand 0, single buffered']
    #allocation3 [shape = 's32[1]{0}', space=sflag, size = 0x4, scoped, tag = 'scoped memory for tpu_custom_call.1']
    #allocation4 [shape = 's32[1]{0}', space=sflag, size = 0x4, scoped, tag = 'scoped memory for tpu_custom_call.1']
    #allocation5 [shape = 'u8[8192]{0}', space=vmem, size = 0x2000, scoped, tag = 'input window, operand 1, single buffered']
    #allocation6 [shape = 's32[1]{0}', space=sflag, size = 0x4, scoped, tag = 'scoped memory for tpu_custom_call.1']
    #allocation7 [shape = 'u8[32768]{0}', space=vmem, size = 0x8000, scoped, tag = 'output window, operand 0, single buffered']
    #allocation8 [shape = 'u8[32768]{0}', space=vmem, size = 0x8000, scoped, tag = 'output window, operand 1, single buffered']
    #allocation9 [shape = 's32[1]{0}', space=sflag, size = 0x4, scoped, tag = 'scoped memory for tpu_custom_call.1']
    #allocation10 [shape = 'u8[32768]{0}', space=vmem, size = 0x8000, scoped, tag = 'output window, operand 2, single buffered']
    %10 = vsyncpa [#allocation3], 0
    %11 = vsyncpa [#allocation6], 0
    %12 = vsyncpa [#allocation4], 0
    %13 = vsyncpa [#allocation9], 0
    // Predicated region
    $region2: #{tpu_custom_call.1} parent=1 // pred_check
      _
    $region3: #{tpu_custom_call.1} parent=1 // pred_check_branch
      %15 = sbr.rel (0) target = $region5
    $region4: #{tpu_custom_call.1} parent=1 // pred_region
      %s16 = sadd.s32 0, 0
      %s17 = smul.u32 4, %s16
      %s19 = ssub.s32 4096, 4096
      %20 = vsyncadd [#allocation3], %s19
      %s21 = smul.addr %s17, 128
      %s22 = scalar_lea.hbm %s0, %s21
      %s23 = sshll.u32 [#allocation2], 4
      %s24 = int_to_ptr.vmem [resolvable:$true] %s23
      %29 = dma.hbm_to_vmem [thread:$0]  %s22, 4096, %s24, [#allocation3], 128, 128, 8
    $region5: #{tpu_custom_call.1} parent=1 // pred_fallthru
      _
    // Predicated region
    $region6: #{tpu_custom_call.1} parent=1 // pred_check
      _
    $region7: #{tpu_custom_call.1} parent=1 // pred_check_branch
      %31 = sbr.rel (0) target = $region9
    $region8: #{tpu_custom_call.1} parent=1 // pred_region
      %s32 = sadd.s32 0, 0
      %s34 = ssub.s32 256, 256
      %35 = vsyncadd [#allocation6], %s34
      %s36 = smul.addr %s32, 128
      %s37 = scalar_lea.hbm %s1, %s36
      %s38 = sshll.u32 [#allocation5], 4
      %s39 = int_to_ptr.vmem [resolvable:$true] %s38
      %44 = dma.hbm_to_vmem [thread:$0]  %s37, 256, %s39, [#allocation6], 128, 128, 8
    $region9: #{tpu_custom_call.1} parent=1 // pred_fallthru
      _
    // Predicated region
    $region10: #{tpu_custom_call.1} parent=1 // pred_check
      _
    $region11: #{tpu_custom_call.1} parent=1 // pred_check_branch
      %46 = sbr.rel (0) target = $region13
    $region12: #{tpu_custom_call.1} parent=1 // pred_region
      %47 = dma.done [#allocation3], 4096
    $region13: #{tpu_custom_call.1} parent=1 // pred_fallthru
      _
    // Predicated region
    $region14: #{tpu_custom_call.1} parent=1 // pred_check
      _
    $region15: #{tpu_custom_call.1} parent=1 // pred_check_branch
      %49 = sbr.rel (0) target = $region17
    $region16: #{tpu_custom_call.1} parent=1 // pred_region
      %50 = dma.done [#allocation6], 256
    $region17: #{tpu_custom_call.1} parent=1 // pred_fallthru
      _
    %s51 = sadd.s32 0, 0
    %s52 = smul.u32 4, %s51
    %s53 = sadd.s32 0, 0
    %p54 = scmp.eq.s32.totalorder 0, 0
    // Predicated region
    $region18: #{tpu_custom_call.1} parent=1 // pred_check
      %p55 = pneg %p54
    $region19: #{tpu_custom_call.1} parent=1 // pred_check_branch
      %57 = sbr.rel (%p55) target = $region21
    $region20: #{tpu_custom_call.1} parent=1 // pred_region
      %58 = vst [vmem:[#allocation7] sm:$0xff] 0.0
      %59 = vst [vmem:[#allocation7 + $0x8] sm:$0xff] 0.0
      %60 = vst [vmem:[#allocation7 + $0x10] sm:$0xff] 0.0
      %61 = vst [vmem:[#allocation7 + $0x18] sm:$0xff] 0.0
      %62 = vst [vmem:[#allocation7 + $0x20] sm:$0xff] 0.0
      %63 = vst [vmem:[#allocation7 + $0x28] sm:$0xff] 0.0
      %64 = vst [vmem:[#allocation7 + $0x30] sm:$0xff] 0.0
      %65 = vst [vmem:[#allocation7 + $0x38] sm:$0xff] 0.0
      %66 = vst [vmem:[#allocation8] sm:$0xff] 0.0
      %67 = vst [vmem:[#allocation8 + $0x8] sm:$0xff] 0.0
      %68 = vst [vmem:[#allocation8 + $0x10] sm:$0xff] 0.0
      %69 = vst [vmem:[#allocation8 + $0x18] sm:$0xff] 0.0
      %70 = vst [vmem:[#allocation8 + $0x20] sm:$0xff] 0.0
      %71 = vst [vmem:[#allocation8 + $0x28] sm:$0xff] 0.0
      %72 = vst [vmem:[#allocation8 + $0x30] sm:$0xff] 0.0
      %73 = vst [vmem:[#allocation8 + $0x38] sm:$0xff] 0.0
      %74 = vst [vmem:[#allocation10] sm:$0xff] 0.0
      %75 = vst [vmem:[#allocation10 + $0x8] sm:$0xff] 0.0
      %76 = vst [vmem:[#allocation10 + $0x10] sm:$0xff] 0.0
      %77 = vst [vmem:[#allocation10 + $0x18] sm:$0xff] 0.0
      %78 = vst [vmem:[#allocation10 + $0x20] sm:$0xff] 0.0
      %79 = vst [vmem:[#allocation10 + $0x28] sm:$0xff] 0.0
      %80 = vst [vmem:[#allocation10 + $0x30] sm:$0xff] 0.0
      %81 = vst [vmem:[#allocation10 + $0x38] sm:$0xff] 0.0
    $region21: #{tpu_custom_call.1} parent=1 // pred_fallthru
      _
    %v82 = vld [vmem:[#allocation5] sm:$0xff]
    %v83 = vld [vmem:[#allocation5 + $0x8] sm:$0xff]
    %v84 = vunpack.c.0.s8 %v82
    %v85 = vunpack.c.1.s8 %v82
    %v86 = vunpack.c.2.s8 %v82
    %v87 = vunpack.c.3.s8 %v82
    %v88 = vunpack.c.0.s8 %v83
    %v89 = vunpack.c.1.s8 %v83
    %v90 = vunpack.c.2.s8 %v83
    %v91 = vunpack.c.3.s8 %v83
    %v92 = vld [vmem:[#allocation2] sm:$0xff]
    %v93 = vld [vmem:[#allocation2 + $0x8] sm:$0xff]
    %v94 = vld [vmem:[#allocation2 + $0x10] sm:$0xff]
    %v95 = vld [vmem:[#allocation2 + $0x18] sm:$0xff]
    %v96 = vld [vmem:[#allocation2 + $0x80] sm:$0xff]
    %v97 = vld [vmem:[#allocation2 + $0x88] sm:$0xff]
    %v98 = vld [vmem:[#allocation2 + $0x90] sm:$0xff]
    %v99 = vld [vmem:[#allocation2 + $0x98] sm:$0xff]
    %vm100 = vcmp.eq.s32.totalorder %v84, 0
    %vm101 = vcmp.eq.s32.totalorder %v85, 0
    %vm102 = vcmp.eq.s32.totalorder %v86, 0
    %vm103 = vcmp.eq.s32.totalorder %v87, 0
    %vm104 = vcmp.eq.s32.totalorder %v88, 0
    %vm105 = vcmp.eq.s32.totalorder %v89, 0
    %vm106 = vcmp.eq.s32.totalorder %v90, 0
    %vm107 = vcmp.eq.s32.totalorder %v91, 0
    %v108 = vld [vmem:[#allocation7] sm:$0xff]
    %v109 = vld [vmem:[#allocation7 + $0x20] sm:$0xff]
    %v110 = vsel %vm100, %v92, 0.0
    %v111 = vsel %vm101, %v93, 0.0
    %v112 = vsel %vm102, %v94, 0.0
    %v113 = vsel %vm103, %v95, 0.0
    %v114 = vsel %vm104, %v96, 0.0
    %v115 = vsel %vm105, %v97, 0.0
    %v116 = vsel %vm106, %v98, 0.0
    %v117 = vsel %vm107, %v99, 0.0
    %v118 = vadd.f32 %v110, %v111
    %v119 = vadd.f32 %v118, %v112
    %v120 = vadd.f32 %v119, %v113
    %v121 = vadd.f32 %v114, %v115
    %v122 = vadd.f32 %v121, %v116
    %v123 = vadd.f32 %v122, %v117
    %v124 = vadd.f32 %v108, %v120
    %v125 = vadd.f32 %v109, %v123
    %126 = vst [vmem:[#allocation7] sm:$0xff] %v124
    %127 = vst [vmem:[#allocation7 + $0x20] sm:$0xff] %v125
    %v128 = vld [vmem:[#allocation8] sm:$0xff]
    %v129 = vld [vmem:[#allocation8 + $0x20] sm:$0xff]
    %v130 = vadd.f32 %v92, %v93
    %v131 = vadd.f32 %v130, %v94
    %v132 = vadd.f32 %v131, %v95
    %v133 = vadd.f32 %v96, %v97
    %v134 = vadd.f32 %v133, %v98
    %v135 = vadd.f32 %v134, %v99
    %v136 = vadd.f32 %v128, %v132
    %v137 = vadd.f32 %v129, %v135
    %138 = vst [vmem:[#allocation8] sm:$0xff] %v136
    %139 = vst [vmem:[#allocation8 + $0x20] sm:$0xff] %v137
    %v140 = vld [vmem:[#allocation10] sm:$0xff]
    %v141 = vld [vmem:[#allocation10 + $0x20] sm:$0xff]
    %v142 = vsel %vm100, 1, 0
    %v143 = vsel %vm101, 1, 0
    %v144 = vsel %vm102, 1, 0
    %v145 = vsel %vm103, 1, 0
    %v146 = vsel %vm104, 1, 0
    %v147 = vsel %vm105, 1, 0
    %v148 = vsel %vm106, 1, 0
    %v149 = vsel %vm107, 1, 0
    %v150 = vcvt.s32.f32 %v142
    %v151 = vcvt.s32.f32 %v143
    %v152 = vcvt.s32.f32 %v144
    %v153 = vcvt.s32.f32 %v145
    %v154 = vcvt.s32.f32 %v146
    %v155 = vcvt.s32.f32 %v147
    %v156 = vcvt.s32.f32 %v148
    %v157 = vcvt.s32.f32 %v149
    %v158 = vadd.f32 %v150, %v151
    %v159 = vadd.f32 %v158, %v152
    %v160 = vadd.f32 %v159, %v153
    %v161 = vadd.f32 %v154, %v155
    %v162 = vadd.f32 %v161, %v156
    %v163 = vadd.f32 %v162, %v157
    %v164 = vadd.f32 %v140, %v160
    %v165 = vadd.f32 %v141, %v163
    %166 = vst [vmem:[#allocation10] sm:$0xff] %v164
    %167 = vst [vmem:[#allocation10 + $0x20] sm:$0xff] %v165
    %s168 = scalar_lea.vmem [#allocation2], 32
    %v169 = vld [vmem:[%s168] sm:$0xff]
    %v170 = vld [vmem:[%s168 + $0x8] sm:$0xff]
    %v171 = vld [vmem:[%s168 + $0x10] sm:$0xff]
    %v172 = vld [vmem:[%s168 + $0x18] sm:$0xff]
    %v173 = vld [vmem:[%s168 + $0x80] sm:$0xff]
    %v174 = vld [vmem:[%s168 + $0x88] sm:$0xff]
    %v175 = vld [vmem:[%s168 + $0x90] sm:$0xff]
    %v176 = vld [vmem:[%s168 + $0x98] sm:$0xff]
    %vm177 = vcmp.eq.s32.totalorder %v84, 1
    %vm178 = vcmp.eq.s32.totalorder %v85, 1
    %vm179 = vcmp.eq.s32.totalorder %v86, 1
    %vm180 = vcmp.eq.s32.totalorder %v87, 1
    %vm181 = vcmp.eq.s32.totalorder %v88, 1
    %vm182 = vcmp.eq.s32.totalorder %v89, 1
    %vm183 = vcmp.eq.s32.totalorder %v90, 1
    %vm184 = vcmp.eq.s32.totalorder %v91, 1
    %s185 = scalar_lea.vmem [#allocation7], 8
    %v186 = vld [vmem:[%s185] sm:$0xff]
    %v187 = vld [vmem:[%s185 + $0x20] sm:$0xff]
    %v188 = vsel %vm177, %v169, 0.0
    %v189 = vsel %vm178, %v170, 0.0
    %v190 = vsel %vm179, %v171, 0.0
    %v191 = vsel %vm180, %v172, 0.0
    %v192 = vsel %vm181, %v173, 0.0
    %v193 = vsel %vm182, %v174, 0.0
    %v194 = vsel %vm183, %v175, 0.0
    %v195 = vsel %vm184, %v176, 0.0
    %v196 = vadd.f32 %v188, %v189
    %v197 = vadd.f32 %v196, %v190
    %v198 = vadd.f32 %v197, %v191
    %v199 = vadd.f32 %v192, %v193
    %v200 = vadd.f32 %v199, %v194
    %v201 = vadd.f32 %v200, %v195
    %v202 = vadd.f32 %v186, %v198
    %v203 = vadd.f32 %v187, %v201
    %204 = vst [vmem:[%s185] sm:$0xff] %v202
    %205 = vst [vmem:[%s185 + $0x20] sm:$0xff] %v203
    %s206 = scalar_lea.vmem [#allocation8], 8
    %v207 = vld [vmem:[%s206] sm:$0xff]
    %v208 = vld [vmem:[%s206 + $0x20] sm:$0xff]
    %v209 = vadd.f32 %v169, %v170
    %v210 = vadd.f32 %v209, %v171
    %v211 = vadd.f32 %v210, %v172
    %v212 = vadd.f32 %v173, %v174
    %v213 = vadd.f32 %v212, %v175
    %v214 = vadd.f32 %v213, %v176
    %v215 = vadd.f32 %v207, %v211
    %v216 = vadd.f32 %v208, %v214
    %217 = vst [vmem:[%s206] sm:$0xff] %v215
    %218 = vst [vmem:[%s206 + $0x20] sm:$0xff] %v216
    %s219 = scalar_lea.vmem [#allocation10], 8
    %v220 = vld [vmem:[%s219] sm:$0xff]
    %v221 = vld [vmem:[%s219 + $0x20] sm:$0xff]
    %v222 = vsel %vm177, 1, 0
    %v223 = vsel %vm178, 1, 0
    %v224 = vsel %vm179, 1, 0
    %v225 = vsel %vm180, 1, 0
    %v226 = vsel %vm181, 1, 0
    %v227 = vsel %vm182, 1, 0
    %v228 = vsel %vm183, 1, 0
    %v229 = vsel %vm184, 1, 0
    %v230 = vcvt.s32.f32 %v222
    %v231 = vcvt.s32.f32 %v223
    %v232 = vcvt.s32.f32 %v224
    %v233 = vcvt.s32.f32 %v225
    %v234 = vcvt.s32.f32 %v226
    %v235 = vcvt.s32.f32 %v227
    %v236 = vcvt.s32.f32 %v228
    %v237 = vcvt.s32.f32 %v229
    %v238 = vadd.f32 %v230, %v231
    %v239 = vadd.f32 %v238, %v232
    %v240 = vadd.f32 %v239, %v233
    %v241 = vadd.f32 %v234, %v235
    %v242 = vadd.f32 %v241, %v236
    %v243 = vadd.f32 %v242, %v237
    %v244 = vadd.f32 %v220, %v240
    %v245 = vadd.f32 %v221, %v243
    %246 = vst [vmem:[%s219] sm:$0xff] %v244
    %247 = vst [vmem:[%s219 + $0x20] sm:$0xff] %v245
    %s248 = scalar_lea.vmem [#allocation2], 64
    %v249 = vld [vmem:[%s248] sm:$0xff]
    %v250 = vld [vmem:[%s248 + $0x8] sm:$0xff]
    %v251 = vld [vmem:[%s248 + $0x10] sm:$0xff]
    %v252 = vld [vmem:[%s248 + $0x18] sm:$0xff]
    %v253 = vld [vmem:[%s248 + $0x80] sm:$0xff]
    %v254 = vld [vmem:[%s248 + $0x88] sm:$0xff]
    %v255 = vld [vmem:[%s248 + $0x90] sm:$0xff]
    %v256 = vld [vmem:[%s248 + $0x98] sm:$0xff]
    %vm257 = vcmp.eq.s32.totalorder %v84, 2
    %vm258 = vcmp.eq.s32.totalorder %v85, 2
    %vm259 = vcmp.eq.s32.totalorder %v86, 2
    %vm260 = vcmp.eq.s32.totalorder %v87, 2
    %vm261 = vcmp.eq.s32.totalorder %v88, 2
    %vm262 = vcmp.eq.s32.totalorder %v89, 2
    %vm263 = vcmp.eq.s32.totalorder %v90, 2
    %vm264 = vcmp.eq.s32.totalorder %v91, 2
    %s265 = scalar_lea.vmem [#allocation7], 16
    %v266 = vld [vmem:[%s265] sm:$0xff]
    %v267 = vld [vmem:[%s265 + $0x20] sm:$0xff]
    %v268 = vsel %vm257, %v249, 0.0
    %v269 = vsel %vm258, %v250, 0.0
    %v270 = vsel %vm259, %v251, 0.0
    %v271 = vsel %vm260, %v252, 0.0
    %v272 = vsel %vm261, %v253, 0.0
    %v273 = vsel %vm262, %v254, 0.0
    %v274 = vsel %vm263, %v255, 0.0
    %v275 = vsel %vm264, %v256, 0.0
    %v276 = vadd.f32 %v268, %v269
    %v277 = vadd.f32 %v276, %v270
    %v278 = vadd.f32 %v277, %v271
    %v279 = vadd.f32 %v272, %v273
    %v280 = vadd.f32 %v279, %v274
    %v281 = vadd.f32 %v280, %v275
    %v282 = vadd.f32 %v266, %v278
    %v283 = vadd.f32 %v267, %v281
    %284 = vst [vmem:[%s265] sm:$0xff] %v282
    %285 = vst [vmem:[%s265 + $0x20] sm:$0xff] %v283
    %s286 = scalar_lea.vmem [#allocation8], 16
    %v287 = vld [vmem:[%s286] sm:$0xff]
    %v288 = vld [vmem:[%s286 + $0x20] sm:$0xff]
    %v289 = vadd.f32 %v249, %v250
    %v290 = vadd.f32 %v289, %v251
    %v291 = vadd.f32 %v290, %v252
    %v292 = vadd.f32 %v253, %v254
    %v293 = vadd.f32 %v292, %v255
    %v294 = vadd.f32 %v293, %v256
    %v295 = vadd.f32 %v287, %v291
    %v296 = vadd.f32 %v288, %v294
    %297 = vst [vmem:[%s286] sm:$0xff] %v295
    %298 = vst [vmem:[%s286 + $0x20] sm:$0xff] %v296
    %s299 = scalar_lea.vmem [#allocation10], 16
    %v300 = vld [vmem:[%s299] sm:$0xff]
    %v301 = vld [vmem:[%s299 + $0x20] sm:$0xff]
    %v302 = vsel %vm257, 1, 0
    %v303 = vsel %vm258, 1, 0
    %v304 = vsel %vm259, 1, 0
    %v305 = vsel %vm260, 1, 0
    %v306 = vsel %vm261, 1, 0
    %v307 = vsel %vm262, 1, 0
    %v308 = vsel %vm263, 1, 0
    %v309 = vsel %vm264, 1, 0
    %v310 = vcvt.s32.f32 %v302
    %v311 = vcvt.s32.f32 %v303
    %v312 = vcvt.s32.f32 %v304
    %v313 = vcvt.s32.f32 %v305
    %v314 = vcvt.s32.f32 %v306
    %v315 = vcvt.s32.f32 %v307
    %v316 = vcvt.s32.f32 %v308
    %v317 = vcvt.s32.f32 %v309
    %v318 = vadd.f32 %v310, %v311
    %v319 = vadd.f32 %v318, %v312
    %v320 = vadd.f32 %v319, %v313
    %v321 = vadd.f32 %v314, %v315
    %v322 = vadd.f32 %v321, %v316
    %v323 = vadd.f32 %v322, %v317
    %v324 = vadd.f32 %v300, %v320
    %v325 = vadd.f32 %v301, %v323
    %326 = vst [vmem:[%s299] sm:$0xff] %v324
    %327 = vst [vmem:[%s299 + $0x20] sm:$0xff] %v325
    %s328 = scalar_lea.vmem [#allocation2], 96
    %v329 = vld [vmem:[%s328] sm:$0xff]
    %v330 = vld [vmem:[%s328 + $0x8] sm:$0xff]
    %v331 = vld [vmem:[%s328 + $0x10] sm:$0xff]
    %v332 = vld [vmem:[%s328 + $0x18] sm:$0xff]
    %v333 = vld [vmem:[%s328 + $0x80] sm:$0xff]
    %v334 = vld [vmem:[%s328 + $0x88] sm:$0xff]
    %v335 = vld [vmem:[%s328 + $0x90] sm:$0xff]
    %v336 = vld [vmem:[%s328 + $0x98] sm:$0xff]
    %vm337 = vcmp.eq.s32.totalorder %v84, 3
    %vm338 = vcmp.eq.s32.totalorder %v85, 3
    %vm339 = vcmp.eq.s32.totalorder %v86, 3
    %vm340 = vcmp.eq.s32.totalorder %v87, 3
    %vm341 = vcmp.eq.s32.totalorder %v88, 3
    %vm342 = vcmp.eq.s32.totalorder %v89, 3
    %vm343 = vcmp.eq.s32.totalorder %v90, 3
    %vm344 = vcmp.eq.s32.totalorder %v91, 3
    %s345 = scalar_lea.vmem [#allocation7], 24
    %v346 = vld [vmem:[%s345] sm:$0xff]
    %v347 = vld [vmem:[%s345 + $0x20] sm:$0xff]
    %v348 = vsel %vm337, %v329, 0.0
    %v349 = vsel %vm338, %v330, 0.0
    %v350 = vsel %vm339, %v331, 0.0
    %v351 = vsel %vm340, %v332, 0.0
    %v352 = vsel %vm341, %v333, 0.0
    %v353 = vsel %vm342, %v334, 0.0
    %v354 = vsel %vm343, %v335, 0.0
    %v355 = vsel %vm344, %v336, 0.0
    %v356 = vadd.f32 %v348, %v349
    %v357 = vadd.f32 %v356, %v350
    %v358 = vadd.f32 %v357, %v351
    %v359 = vadd.f32 %v352, %v353
    %v360 = vadd.f32 %v359, %v354
    %v361 = vadd.f32 %v360, %v355
    %v362 = vadd.f32 %v346, %v358
    %v363 = vadd.f32 %v347, %v361
    %364 = vst [vmem:[%s345] sm:$0xff] %v362
    %365 = vst [vmem:[%s345 + $0x20] sm:$0xff] %v363
    %s366 = scalar_lea.vmem [#allocation8], 24
    %v367 = vld [vmem:[%s366] sm:$0xff]
    %v368 = vld [vmem:[%s366 + $0x20] sm:$0xff]
    %v369 = vadd.f32 %v329, %v330
    %v370 = vadd.f32 %v369, %v331
    %v371 = vadd.f32 %v370, %v332
    %v372 = vadd.f32 %v333, %v334
    %v373 = vadd.f32 %v372, %v335
    %v374 = vadd.f32 %v373, %v336
    %v375 = vadd.f32 %v367, %v371
    %v376 = vadd.f32 %v368, %v374
    %377 = vst [vmem:[%s366] sm:$0xff] %v375
    %378 = vst [vmem:[%s366 + $0x20] sm:$0xff] %v376
    %s379 = scalar_lea.vmem [#allocation10], 24
    %v380 = vld [vmem:[%s379] sm:$0xff]
    %v381 = vld [vmem:[%s379 + $0x20] sm:$0xff]
    %v382 = vsel %vm337, 1, 0
    %v383 = vsel %vm338, 1, 0
    %v384 = vsel %vm339, 1, 0
    %v385 = vsel %vm340, 1, 0
    %v386 = vsel %vm341, 1, 0
    %v387 = vsel %vm342, 1, 0
    %v388 = vsel %vm343, 1, 0
    %v389 = vsel %vm344, 1, 0
    %v390 = vcvt.s32.f32 %v382
    %v391 = vcvt.s32.f32 %v383
    %v392 = vcvt.s32.f32 %v384
    %v393 = vcvt.s32.f32 %v385
    %v394 = vcvt.s32.f32 %v386
    %v395 = vcvt.s32.f32 %v387
    %v396 = vcvt.s32.f32 %v388
    %v397 = vcvt.s32.f32 %v389
    %v398 = vadd.f32 %v390, %v391
    %v399 = vadd.f32 %v398, %v392
    %v400 = vadd.f32 %v399, %v393
    %v401 = vadd.f32 %v394, %v395
    %v402 = vadd.f32 %v401, %v396
    %v403 = vadd.f32 %v402, %v397
    %v404 = vadd.f32 %v380, %v400
    %v405 = vadd.f32 %v381, %v403
    %406 = vst [vmem:[%s379] sm:$0xff] %v404
    %407 = vst [vmem:[%s379 + $0x20] sm:$0xff] %v405
    // Predicated region
    $region22: #{tpu_custom_call.1} parent=1 // pred_check
      _
    $region23: #{tpu_custom_call.1} parent=1 // pred_check_branch
      %409 = sbr.rel (0) target = $region25
    $region24: #{tpu_custom_call.1} parent=1 // pred_region
      %s411 = ssub.s32 1024, 1024
      %412 = vsyncadd [#allocation4], %s411
      %s413 = sshll.u32 [#allocation7], 4
      %s414 = int_to_ptr.vmem [resolvable:$true] %s413
      %419 = dma.vmem_to_hbm [thread:$0]  %s414, 1024, %s2, [#allocation4], 128, 128, 8
    $region25: #{tpu_custom_call.1} parent=1 // pred_fallthru
      _
    // Predicated region
    $region26: #{tpu_custom_call.1} parent=1 // pred_check
      _
    $region27: #{tpu_custom_call.1} parent=1 // pred_check_branch
      %421 = sbr.rel (0) target = $region29
    $region28: #{tpu_custom_call.1} parent=1 // pred_region
      %s423 = ssub.s32 1024, 1024
      %424 = vsyncadd [#allocation9], %s423
      %s425 = sshll.u32 [#allocation8], 4
      %s426 = int_to_ptr.vmem [resolvable:$true] %s425
      %431 = dma.vmem_to_hbm [thread:$0]  %s426, 1024, %s3, [#allocation9], 128, 128, 8
    $region29: #{tpu_custom_call.1} parent=1 // pred_fallthru
      _
    // Predicated region
    $region30: #{tpu_custom_call.1} parent=1 // pred_check
      _
    $region31: #{tpu_custom_call.1} parent=1 // pred_check_branch
      %433 = sbr.rel (0) target = $region33
    $region32: #{tpu_custom_call.1} parent=1 // pred_region
      %s435 = ssub.s32 1024, 1024
      %436 = vsyncadd [#allocation9], %s435
      %s437 = sshll.u32 [#allocation10], 4
      %s438 = int_to_ptr.vmem [resolvable:$true] %s437
      %443 = dma.vmem_to_hbm [thread:$0]  %s438, 1024, %s4, [#allocation9], 128, 128, 8
    $region33: #{tpu_custom_call.1} parent=1 // pred_fallthru
      _
    // Predicated region
    $region34: #{tpu_custom_call.1} parent=1 // pred_check
      _
    $region35: #{tpu_custom_call.1} parent=1 // pred_check_branch
      %445 = sbr.rel (0) target = $region37
    $region36: #{tpu_custom_call.1} parent=1 // pred_region
      %446 = dma.done [#allocation4], 1024
    $region37: #{tpu_custom_call.1} parent=1 // pred_fallthru
      _
    // Predicated region
    $region38: #{tpu_custom_call.1} parent=1 // pred_check
      _
    $region39: #{tpu_custom_call.1} parent=1 // pred_check_branch
      %448 = sbr.rel (0) target = $region41
    $region40: #{tpu_custom_call.1} parent=1 // pred_region
      %449 = dma.done [#allocation9], 1024
    $region41: #{tpu_custom_call.1} parent=1 // pred_fallthru
      _
    // Predicated region
    $region42: #{tpu_custom_call.1} parent=1 // pred_check
      _
    $region43: #{tpu_custom_call.1} parent=1 // pred_check_branch
      %451 = sbr.rel (0) target = $region45
    $region44: #{tpu_custom_call.1} parent=1 // pred_region
      %452 = dma.done [#allocation9], 1024
    $region45: #{tpu_custom_call.1} parent=1 // pred_fallthru
      _
    %453 = vsyncpa [#allocation3], 1
    %454 = vsyncpa [#allocation6], 1
    %455 = vsyncpa [#allocation4], 1
    %456 = vsyncpa [#allocation9], 1

</llo_original>
